<compile_context>
chip_gen: v5e
topology: v5e:2x2
jax: 0.10.0
libtpu: 0.0.40
codegen_flags: <defaults>
</compile_context>

<pallas_src>
import jax
import jax.numpy as jnp
from jax import lax
from jax.experimental import pallas as pl
from jax.experimental.pallas import tpu as pltpu


def _round_up(a, b):
    return (a + b - 1) // b * b


def _flatten_head_kernel(x_ref, w_ref, b_ref, o_ref, acc_ref):
    # x_ref: [tm, tk]   tile of x2d
    # w_ref: [tn, tk]   tile of weight (native [T, nf] layout)
    # b_ref: [1,  tn]   tile of bias
    # o_ref: [tm, tn]   output tile
    # acc_ref: VMEM f32 accumulator, resident across the k (reduction) axis.
    k = pl.program_id(2)

    @pl.when(k == 0)
    def _():
        acc_ref[...] = jnp.zeros_like(acc_ref)

    # Contract x (dim 1) with w (dim 1): [tm, tk] x [tn, tk] -> [tm, tn] on the MXU,
    # f32 accumulation.  RHS-transposed contraction is native; no transpose needed.
    acc_ref[...] += lax.dot_general(
        x_ref[...], w_ref[...],
        dimension_numbers=(((1,), (1,)), ((), ())),
        preferred_element_type=jnp.float32,
    )

    @pl.when(k == pl.num_programs(2) - 1)
    def _():
        o_ref[...] = (acc_ref[...] + b_ref[...].astype(jnp.float32)).astype(o_ref.dtype)


def flatten_head_forward(x, weight, bias, head_dropout=0.0, training=False,
                         compute_dtype=None):
    """x: [B, n_vars, d_model, patch_num]; weight: [T, nf]; bias: [T].

    Returns [B, n_vars, T], matching
        nn.Flatten(start_dim=-2) -> nn.Linear(nf, T) -> nn.Dropout(p)
    in eval mode (dropout is identity).  If compute_dtype (e.g. jnp.bfloat16) is
    given, x and weight are cast to it before the MXU; accumulation stays f32.
    """
    B, n_vars, d_model, patch_num = x.shape
    nf = d_model * patch_num
    T = weight.shape[0]
    assert weight.shape == (T, nf)
    out_dtype = x.dtype

    M = B * n_vars
    x2d = x.reshape(M, nf)                      # pure layout, no data movement

    if compute_dtype is not None:
        x2d = x2d.astype(compute_dtype)
        weight = weight.astype(compute_dtype)

    # Tile selection: 128-aligned lane dims, sublane granularity 16 (safe for f32 & bf16).
    SUB, LANE = 16, 128
    tm = min(256, _round_up(M, SUB))
    tn = 256 if T >= 256 else LANE
    tk = min(512, _round_up(nf, LANE))
    M_pad = _round_up(M, tm)
    T_pad = _round_up(T, tn)                    # lane-dense output (unmasked vst)
    nf_pad = _round_up(nf, tk)

    # Zero padding keeps the math exact (padded rows/cols contribute 0; extra output
    # columns are sliced off below).
    x_p = jnp.pad(x2d, ((0, M_pad - M), (0, nf_pad - nf)))
    w_p = jnp.pad(weight, ((0, T_pad - T), (0, nf_pad - nf)))
    b_p = jnp.pad(bias.astype(jnp.float32).reshape(1, T), ((0, 0), (0, T_pad - T)))

    grid = (M_pad // tm, T_pad // tn, nf_pad // tk)

    out_p = pl.pallas_call(
        _flatten_head_kernel,
        out_shape=jax.ShapeDtypeStruct((M_pad, T_pad), out_dtype),
        grid_spec=pltpu.PrefetchScalarGridSpec(
            num_scalar_prefetch=0,
            grid=grid,
            in_specs=[
                pl.BlockSpec((tm, tk), lambda i, j, k: (i, k)),   # x2d tile
                pl.BlockSpec((tn, tk), lambda i, j, k: (j, k)),   # weight tile [T, nf]
                pl.BlockSpec((1, tn), lambda i, j, k: (0, j)),    # bias tile per N column
            ],
            out_specs=pl.BlockSpec((tm, tn), lambda i, j, k: (i, j)),
            scratch_shapes=[pltpu.VMEM((tm, tn), jnp.float32)],
        ),
        compiler_params=pltpu.CompilerParams(
            dimension_semantics=("parallel", "parallel", "arbitrary")),
    )(x_p, w_p, b_p)

    out2d = out_p[:M, :T]
    # Dropout: p = head_dropout; identity in eval mode (p defaults to 0).
    return out2d.reshape(B, n_vars, T)


if __name__ == "__main__":
    # Shapes consistent with the module: x [B, n_vars, d_model, patch_num]
    B, n_vars, d_model, patch_num = 2, 4, 16, 16
    nf = d_model * patch_num                    # 256
    target_window = 96                          # deliberately not 128-aligned

    key = jax.random.PRNGKey(0)
    kx, kw, kb = jax.random.split(key, 3)

    x = jax.random.normal(kx, (B, n_vars, d_model, patch_num), dtype=jnp.float32)
    bound = 1.0 / (nf ** 0.5)
    weight = jax.random.uniform(kw, (target_window, nf), jnp.float32, -bound, bound)
    bias = jax.random.uniform(kb, (target_window,), jnp.float32, -bound, bound)

    # f32 path — strict check against the plain-JAX reference of the same math.
    out = flatten_head_forward(x, weight, bias, head_dropout=0.0)
    out = jax.block_until_ready(out)
    ref = x.reshape(B, n_vars, nf) @ weight.T + bias
    assert out.shape == (B, n_vars, target_window)
    assert jnp.allclose(out, ref, atol=1e-5, rtol=1e-5)

    # bf16 MXU path — compare against a matching bf16-input / f32-accumulate reference.
    out_bf16 = flatten_head_forward(x, weight, bias, compute_dtype=jnp.bfloat16)
    out_bf16 = jax.block_until_ready(out_bf16)
    ref_bf16 = (
        jnp.dot(x.reshape(B * n_vars, nf).astype(jnp.bfloat16),
                weight.astype(jnp.bfloat16).T,
                preferred_element_type=jnp.float32)
        + bias
    ).astype(x.dtype).reshape(B, n_vars, target_window)
    assert jnp.allclose(out_bf16, ref_bf16, atol=1e-3, rtol=1e-3)

    print("KERNEL_OK")
</pallas_src>

<mosaic_0001>
module attributes {stable_mosaic.version = 11 : i64} {
  func.func @_flatten_head_kernel(%arg0: i32, %arg1: i32, %arg2: i32, %arg3: memref<16x256xf32, #tpu.memory_space<vmem>>, %arg4: memref<128x256xf32, #tpu.memory_space<vmem>>, %arg5: memref<1x128xf32, #tpu.memory_space<vmem>>, %arg6: memref<16x128xf32, #tpu.memory_space<vmem>>, %arg7: memref<16x128xf32, #tpu.memory_space<vmem>>) attributes {dimension_semantics = [#tpu.dimension_semantics<parallel>, #tpu.dimension_semantics<parallel>, #tpu.dimension_semantics<arbitrary>], iteration_bounds = array<i64: 1, 1, 1>, scalar_prefetch = 0 : i64, scratch_operands = 1 : i64, tpu.core_type = #tpu.core_type<tc>, window_params = [{transform_indices = @transform_0, window_bounds = array<i64: 16, 256>}, {transform_indices = @transform_1, window_bounds = array<i64: 128, 256>}, {transform_indices = @transform_2, window_bounds = array<i64: 1, 128>}, {transform_indices = @transform_3, window_bounds = array<i64: 16, 128>}]} {
    %c0_i32 = arith.constant 0 : i32
    %0 = arith.cmpi eq, %arg2, %c0_i32 : i32
    %1 = arith.extui %0 : i1 to i32
    %c0_i32_0 = arith.constant 0 : i32
    %2 = arith.cmpi ne, %1, %c0_i32_0 : i32
    scf.if %2 {
      %cst_10 = arith.constant 0.000000e+00 : f32
      %12 = vector.broadcast %cst_10 : f32 to vector<16x128xf32>
      %c0_11 = arith.constant 0 : index
      %c0_12 = arith.constant 0 : index
      %13 = vector.load %arg7[%c0_11, %c0_12] : memref<16x128xf32, #tpu.memory_space<vmem>>, vector<16x128xf32>
      tpu.vector_store %arg7[%c0_11, %c0_12], %12 {strides = array<i32>} : memref<16x128xf32, #tpu.memory_space<vmem>>, vector<16x128xf32>,
    } else {
    }
    %c0 = arith.constant 0 : index
    %c0_1 = arith.constant 0 : index
    %3 = vector.load %arg7[%c0, %c0_1] : memref<16x128xf32, #tpu.memory_space<vmem>>, vector<16x128xf32>
    %c0_2 = arith.constant 0 : index
    %c0_3 = arith.constant 0 : index
    %4 = vector.load %arg3[%c0_2, %c0_3] : memref<16x256xf32, #tpu.memory_space<vmem>>, vector<16x256xf32>
    %c0_4 = arith.constant 0 : index
    %c0_5 = arith.constant 0 : index
    %5 = vector.load %arg4[%c0_4, %c0_5] : memref<128x256xf32, #tpu.memory_space<vmem>>, vector<128x256xf32>
    %cst = arith.constant dense<0.000000e+00> : vector<16x128xf32>
    %6 = tpu.matmul %4, %5, %cst {dimension_numbers = #tpu.dot_dimension_numbers<[1], [1], [0], [0], [0, 0, 1, 0], [], []>} : vector<16x256xf32>, vector<128x256xf32>, vector<16x128xf32> -> vector<16x128xf32>
    %7 = arith.addf %3, %6 : vector<16x128xf32>
    %c0_6 = arith.constant 0 : index
    %c0_7 = arith.constant 0 : index
    %8 = vector.load %arg7[%c0_6, %c0_7] : memref<16x128xf32, #tpu.memory_space<vmem>>, vector<16x128xf32>
    tpu.vector_store %arg7[%c0_6, %c0_7], %7 {strides = array<i32>} : memref<16x128xf32, #tpu.memory_space<vmem>>, vector<16x128xf32>,
    %c0_i32_8 = arith.constant 0 : i32
    %9 = arith.cmpi eq, %arg2, %c0_i32_8 : i32
    %10 = arith.extui %9 : i1 to i32
    %c0_i32_9 = arith.constant 0 : i32
    %11 = arith.cmpi ne, %10, %c0_i32_9 : i32
    scf.if %11 {
      %c0_10 = arith.constant 0 : index
      %c0_11 = arith.constant 0 : index
      %12 = vector.load %arg7[%c0_10, %c0_11] : memref<16x128xf32, #tpu.memory_space<vmem>>, vector<16x128xf32>
      %c0_12 = arith.constant 0 : index
      %c0_13 = arith.constant 0 : index
      %13 = vector.load %arg5[%c0_12, %c0_13] : memref<1x128xf32, #tpu.memory_space<vmem>>, vector<1x128xf32>
      %14 = vector.broadcast %13 : vector<1x128xf32> to vector<16x128xf32>
      %15 = arith.addf %12, %14 : vector<16x128xf32>
      %c0_14 = arith.constant 0 : index
      %c0_15 = arith.constant 0 : index
      %16 = vector.load %arg6[%c0_14, %c0_15] : memref<16x128xf32, #tpu.memory_space<vmem>>, vector<16x128xf32>
      tpu.vector_store %arg6[%c0_14, %c0_15], %15 {strides = array<i32>} : memref<16x128xf32, #tpu.memory_space<vmem>>, vector<16x128xf32>,
    } else {
    }
    return
  }
  func.func @transform_0(%arg0: i32, %arg1: i32, %arg2: i32) -> (i32, i32) {
    %c0_i32 = arith.constant 0 : i32
    return %arg0, %arg2 : i32, i32
  }
  func.func @transform_1(%arg0: i32, %arg1: i32, %arg2: i32) -> (i32, i32) {
    %c0_i32 = arith.constant 0 : i32
    return %arg1, %arg2 : i32, i32
  }
  func.func @transform_2(%arg0: i32, %arg1: i32, %arg2: i32) -> (i32, i32) {
    %c0_i32 = arith.constant 0 : i32
    %c0_i32_0 = arith.constant 0 : i32
    return %c0_i32, %arg1 : i32, i32
  }
  func.func @transform_3(%arg0: i32, %arg1: i32, %arg2: i32) -> (i32, i32) {
    %c0_i32 = arith.constant 0 : i32
    return %arg0, %arg1 : i32, i32
  }
}

</mosaic_0001>

<llo_original>
// kernel: tpu_custom_call.1
$region0: #{tpu_custom_call.1}
  #allocation0 [shape = 'u32[]', space=smem, size = 0x4, offset = 0x4, fixed_abs, tag = 'smem constant byte address 0x4 - core index']
  #allocation1 [shape = 'u32[72,128]{1,0:T(1,128)}', space=vmem, size = 0x9000, scoped, tag = 'internal scratch']
  #allocation2 [shape = 'f32[16,128]{1,0:T(8,128)}', space=vmem, size = 0x2000, scoped, tag = 'scratch operand']
  %s0 = inlined_call_operand.hbm [shape: f32[16,256], index: 0, kind: input, shape index: {}]
  %s1 = inlined_call_operand.hbm [shape: f32[128,256], index: 1, kind: input, shape index: {}]
  %s2 = inlined_call_operand.vmem [shape: f32[1,128], index: 2, kind: input, shape index: {}]
  %s3 = inlined_call_operand.hbm [shape: f32[16,128], index: 3, kind: output, shape index: {}]
  %s4 = sld [smem:[#allocation0]]
  $region38: #{tpu_custom_call.1} parent=0
    _
  %s6 = ssub.s32 1, %s4
  %s7 = scalar_select 0, %s6, %s4
  $region1: #{tpu_custom_call.1} parent=0
    #allocation3 [shape = 'u8[16384]{0}', space=vmem, size = 0x4000, scoped, tag = 'input window, operand 0, single buffered']
    #allocation4 [shape = 's32[1]{0}', space=sflag, size = 0x4, scoped, tag = 'scoped memory for tpu_custom_call.1']
    #allocation5 [shape = 's32[1]{0}', space=sflag, size = 0x4, scoped, tag = 'scoped memory for tpu_custom_call.1']
    #allocation6 [shape = 'u8[131072]{0}', space=vmem, size = 0x20000, scoped, tag = 'input window, operand 1, single buffered']
    #allocation7 [shape = 's32[1]{0}', space=sflag, size = 0x4, scoped, tag = 'scoped memory for tpu_custom_call.1']
    #allocation8 [shape = 'u8[8192]{0}', space=vmem, size = 0x2000, scoped, tag = 'output window, operand 0, single buffered']
    %8 = vsyncpa [#allocation4], 0
    %9 = vsyncpa [#allocation7], 0
    %10 = vsyncpa [#allocation5], 0
    // Predicated region
    $region2: #{tpu_custom_call.1} parent=1 // pred_check
      _
    $region3: #{tpu_custom_call.1} parent=1 // pred_check_branch
      %12 = sbr.rel (0) target = $region5
    $region4: #{tpu_custom_call.1} parent=1 // pred_region
      %14 = vsyncadd [#allocation4], 0
      %s15 = sshll.u32 %s0, 4
      %s16 = int_to_ptr.hbm [resolvable:$true] %s15
      %s17 = sshll.u32 [#allocation3], 4
      %s18 = int_to_ptr.vmem [resolvable:$true] %s17
      %23 = dma.hbm_to_vmem [thread:$0]  %s16, 512, %s18, [#allocation4], 256, 256, 16
    $region5: #{tpu_custom_call.1} parent=1 // pred_fallthru
      _
    // Predicated region
    $region6: #{tpu_custom_call.1} parent=1 // pred_check
      _
    $region7: #{tpu_custom_call.1} parent=1 // pred_check_branch
      %25 = sbr.rel (0) target = $region9
    $region8: #{tpu_custom_call.1} parent=1 // pred_region
      %27 = vsyncadd [#allocation7], 0
      %s28 = sshll.u32 %s1, 4
      %s29 = int_to_ptr.hbm [resolvable:$true] %s28
      %s30 = sshll.u32 [#allocation6], 4
      %s31 = int_to_ptr.vmem [resolvable:$true] %s30
      %36 = dma.hbm_to_vmem [thread:$0]  %s29, 4096, %s31, [#allocation7], 256, 256, 16
    $region9: #{tpu_custom_call.1} parent=1 // pred_fallthru
      _
    // Predicated region
    $region10: #{tpu_custom_call.1} parent=1 // pred_check
      _
    $region11: #{tpu_custom_call.1} parent=1 // pred_check_branch
      %38 = sbr.rel (0) target = $region13
    $region12: #{tpu_custom_call.1} parent=1 // pred_region
      _
    $region13: #{tpu_custom_call.1} parent=1 // pred_fallthru
      _
    // Predicated region
    $region14: #{tpu_custom_call.1} parent=1 // pred_check
      _
    $region15: #{tpu_custom_call.1} parent=1 // pred_check_branch
      %40 = sbr.rel (0) target = $region17
    $region16: #{tpu_custom_call.1} parent=1 // pred_region
      %42 = dma.done [#allocation4], 512
    $region17: #{tpu_custom_call.1} parent=1 // pred_fallthru
      _
    // Predicated region
    $region18: #{tpu_custom_call.1} parent=1 // pred_check
      _
    $region19: #{tpu_custom_call.1} parent=1 // pred_check_branch
      %44 = sbr.rel (0) target = $region21
    $region20: #{tpu_custom_call.1} parent=1 // pred_region
      %46 = dma.done [#allocation7], 4096
    $region21: #{tpu_custom_call.1} parent=1 // pred_fallthru
      _
    %p47 = scmp.eq.s32.totalorder 0, 0
    // Predicated region
    $region22: #{tpu_custom_call.1} parent=1 // pred_check
      %p48 = pneg %p47
    $region23: #{tpu_custom_call.1} parent=1 // pred_check_branch
      %50 = sbr.rel (%p48) target = $region25
    $region24: #{tpu_custom_call.1} parent=1 // pred_region
      %51 = vst [vmem:[#allocation2] sm:$0xff] 0.0
      %52 = vst [vmem:[#allocation2 + $0x8] sm:$0xff] 0.0
    $region25: #{tpu_custom_call.1} parent=1 // pred_fallthru
      _
    %v53 = vld [vmem:[#allocation2] sm:$0xff]
    %v54 = vld [vmem:[#allocation2 + $0x8] sm:$0xff]
    %v55 = vld [vmem:[#allocation3] sm:$0xff]
    %v56 = vld [vmem:[#allocation3 + $0x8] sm:$0xff]
    %v57 = vld [vmem:[#allocation3 + $0x10] sm:$0xff]
    %v58 = vld [vmem:[#allocation3 + $0x18] sm:$0xff]
    %v59 = vld [vmem:[#allocation6] sm:$0xff]
    %v60 = vld [vmem:[#allocation6 + $0x8] sm:$0xff]
    %v61 = vld [vmem:[#allocation6 + $0x10] sm:$0xff]
    %v62 = vld [vmem:[#allocation6 + $0x18] sm:$0xff]
    %v63 = vld [vmem:[#allocation6 + $0x20] sm:$0xff]
    %v64 = vld [vmem:[#allocation6 + $0x28] sm:$0xff]
    %v65 = vld [vmem:[#allocation6 + $0x30] sm:$0xff]
    %v66 = vld [vmem:[#allocation6 + $0x38] sm:$0xff]
    %v67 = vld [vmem:[#allocation6 + $0x40] sm:$0xff]
    %v68 = vld [vmem:[#allocation6 + $0x48] sm:$0xff]
    %v69 = vld [vmem:[#allocation6 + $0x50] sm:$0xff]
    %v70 = vld [vmem:[#allocation6 + $0x58] sm:$0xff]
    %v71 = vld [vmem:[#allocation6 + $0x60] sm:$0xff]
    %v72 = vld [vmem:[#allocation6 + $0x68] sm:$0xff]
    %v73 = vld [vmem:[#allocation6 + $0x70] sm:$0xff]
    %v74 = vld [vmem:[#allocation6 + $0x78] sm:$0xff]
    %v75 = vld [vmem:[#allocation6 + $0x80] sm:$0xff]
    %v76 = vld [vmem:[#allocation6 + $0x88] sm:$0xff]
    %v77 = vld [vmem:[#allocation6 + $0x90] sm:$0xff]
    %v78 = vld [vmem:[#allocation6 + $0x98] sm:$0xff]
    %v79 = vld [vmem:[#allocation6 + $0xa0] sm:$0xff]
    %v80 = vld [vmem:[#allocation6 + $0xa8] sm:$0xff]
    %v81 = vld [vmem:[#allocation6 + $0xb0] sm:$0xff]
    %v82 = vld [vmem:[#allocation6 + $0xb8] sm:$0xff]
    %v83 = vld [vmem:[#allocation6 + $0xc0] sm:$0xff]
    %v84 = vld [vmem:[#allocation6 + $0xc8] sm:$0xff]
    %v85 = vld [vmem:[#allocation6 + $0xd0] sm:$0xff]
    %v86 = vld [vmem:[#allocation6 + $0xd8] sm:$0xff]
    %v87 = vld [vmem:[#allocation6 + $0xe0] sm:$0xff]
    %v88 = vld [vmem:[#allocation6 + $0xe8] sm:$0xff]
    %v89 = vld [vmem:[#allocation6 + $0xf0] sm:$0xff]
    %v90 = vld [vmem:[#allocation6 + $0xf8] sm:$0xff]
    %91 = vmatpush.xpose.msra.mxu0 %v89
    %92 = vmatpush.xpose.msra.mxu0 %v87
    %93 = vmatpush.xpose.msra.mxu0 %v85
    %94 = vmatpush.xpose.msra.mxu0 %v83
    %95 = vmatpush.xpose.msra.mxu0 %v81
    %96 = vmatpush.xpose.msra.mxu0 %v79
    %97 = vmatpush.xpose.msra.mxu0 %v77
    %98 = vmatpush.xpose.msra.mxu0 %v75
    %99 = vmatpush.xpose.msra.mxu0 %v73
    %100 = vmatpush.xpose.msra.mxu0 %v71
    %101 = vmatpush.xpose.msra.mxu0 %v69
    %102 = vmatpush.xpose.msra.mxu0 %v67
    %103 = vmatpush.xpose.msra.mxu0 %v65
    %104 = vmatpush.xpose.msra.mxu0 %v63
    %105 = vmatpush.xpose.msra.mxu0 %v61
    %106 = vmatpush.xpose.msra.mxu0 %v59
    %107 = vmatmul.f32.gmra.mxu0 %v55
    %v108 = vpop.f32.mrf.mxu0
    %v109 = vadd.f32 0.0, %v108
    %110 = vmatmul.f32.gmra.mxu0 %v57
    %v111 = vpop.f32.mrf.mxu0
    %v112 = vadd.f32 0.0, %v111
    %113 = vdwg.mxu0
    %114 = vmatpush.xpose.msra.mxu0 %v90
    %115 = vmatpush.xpose.msra.mxu0 %v88
    %116 = vmatpush.xpose.msra.mxu0 %v86
    %117 = vmatpush.xpose.msra.mxu0 %v84
    %118 = vmatpush.xpose.msra.mxu0 %v82
    %119 = vmatpush.xpose.msra.mxu0 %v80
    %120 = vmatpush.xpose.msra.mxu0 %v78
    %121 = vmatpush.xpose.msra.mxu0 %v76
    %122 = vmatpush.xpose.msra.mxu0 %v74
    %123 = vmatpush.xpose.msra.mxu0 %v72
    %124 = vmatpush.xpose.msra.mxu0 %v70
    %125 = vmatpush.xpose.msra.mxu0 %v68
    %126 = vmatpush.xpose.msra.mxu0 %v66
    %127 = vmatpush.xpose.msra.mxu0 %v64
    %128 = vmatpush.xpose.msra.mxu0 %v62
    %129 = vmatpush.xpose.msra.mxu0 %v60
    %130 = vmatmul.f32.gmra.mxu0 %v56
    %v131 = vpop.f32.mrf.mxu0
    %v132 = vadd.f32 %v109, %v131
    %133 = vmatmul.f32.gmra.mxu0 %v58
    %v134 = vpop.f32.mrf.mxu0
    %v135 = vadd.f32 %v112, %v134
    %136 = vdwg.mxu0
    %v137 = vadd.f32 %v53, %v132
    %v138 = vadd.f32 %v54, %v135
    %139 = vst [vmem:[#allocation2] sm:$0xff] %v137
    %140 = vst [vmem:[#allocation2 + $0x8] sm:$0xff] %v138
    // Predicated region
    $region26: #{tpu_custom_call.1} parent=1 // pred_check
      %p141 = pneg %p47
    $region27: #{tpu_custom_call.1} parent=1 // pred_check_branch
      %143 = sbr.rel (%p141) target = $region29
    $region28: #{tpu_custom_call.1} parent=1 // pred_region
      %v144 = vld [vmem:[#allocation2] sm:$0xff]
      %v145 = vld [vmem:[#allocation2 + $0x8] sm:$0xff]
      %v146 = vld [vmem:[%s2] sm:$0x1]
      %v148 = vperm.slane %v146, 0
      %v150 = vadd.f32 %v144, %v148
      %v151 = vadd.f32 %v145, %v148
      %152 = vst [vmem:[#allocation8] sm:$0xff] %v150
      %153 = vst [vmem:[#allocation8 + $0x8] sm:$0xff] %v151
    $region29: #{tpu_custom_call.1} parent=1 // pred_fallthru
      _
    // Predicated region
    $region30: #{tpu_custom_call.1} parent=1 // pred_check
      _
    $region31: #{tpu_custom_call.1} parent=1 // pred_check_branch
      %155 = sbr.rel (0) target = $region33
    $region32: #{tpu_custom_call.1} parent=1 // pred_region
      %157 = vsyncadd [#allocation5], 0
      %s158 = sshll.u32 [#allocation8], 4
      %s159 = int_to_ptr.vmem [resolvable:$true] %s158
      %s160 = sshll.u32 %s3, 4
      %s161 = int_to_ptr.hbm [resolvable:$true] %s160
      %166 = dma.vmem_to_hbm [thread:$0]  %s159, 256, %s161, [#allocation5], 128, 128, 8
    $region33: #{tpu_custom_call.1} parent=1 // pred_fallthru
      _
    // Predicated region
    $region34: #{tpu_custom_call.1} parent=1 // pred_check
      _
    $region35: #{tpu_custom_call.1} parent=1 // pred_check_branch
      %168 = sbr.rel (0) target = $region37
    $region36: #{tpu_custom_call.1} parent=1 // pred_region
      %170 = dma.done [#allocation5], 256
    $region37: #{tpu_custom_call.1} parent=1 // pred_fallthru
      _
    %171 = vsyncpa [#allocation4], 1
    %172 = vsyncpa [#allocation7], 1
    %173 = vsyncpa [#allocation5], 1

</llo_original>
